<compile_context>
chip_gen: v7x
topology: tpu7x:2x2x1
jax: 0.10.0
libtpu: 0.0.40
codegen_flags: <defaults>
</compile_context>

<pallas_src>
import math
import functools

import jax
import jax.numpy as jnp
from jax import lax
from jax.experimental import pallas as pl
from jax.experimental.pallas import tpu as pltpu

_LANE = 128


def _round_up(x: int, m: int) -> int:
    return ((x + m - 1) // m) * m


def _sublane(itemsize: int) -> int:
    # Sub-32-bit dtypes pack along sublanes: f32 -> 8, bf16 -> 16, int8/fp8 -> 32.
    return max(8, 32 // max(int(itemsize), 1))


def _vmem_capacity_bytes() -> int:
    try:
        return int(pltpu.get_tpu_info().vmem_capacity_bytes)
    except Exception:
        return 64 * 1024 * 1024  # conservative fallback (v7x per-TensorCore VMEM)


def _pick_tile(total: int, cap: int) -> int:
    """Largest multiple of 128 <= cap that divides `total` (total is a mult of 128)."""
    cap = max(cap, _LANE)
    best = min(_LANE, total)
    c = _LANE
    while c <= min(cap, total):
        if total % c == 0:
            best = c
        c += _LANE
    return best


def _block_footprint(tm, tn, tk, x_item, w_item, o_item, with_acc):
    """VMEM bytes for one grid step with Pallas' default double buffering."""
    f = 2 * tm * tk * x_item                    # x block
    f += 2 * tn * tk * w_item                   # weight block
    f += 2 * 8 * _round_up(tn, _LANE) * 4       # bias block (f32, sublane padded)
    f += 2 * tm * tn * o_item                   # output block
    if with_acc:
        f += tm * tn * 4                        # f32 accumulator scratch
    return f


def _choose_tiles(batch, out_dim, in_dim, x_item, w_item, o_item,
                  block_m, block_n, budget):
    sub = _sublane(x_item)

    # Output columns: lane-dense multiple of 128; 256 preferred (2x256^2 MXU).
    n_pad = _round_up(out_dim, _LANE)
    tn = _pick_tile(n_pad, block_n)

    # Batch rows: one block if the batch fits, else ~block_m tiles, minimal pad.
    m_pad = _round_up(batch, sub)
    if m_pad > block_m:
        m_tiles = pl.cdiv(batch, block_m)
        tm = _round_up(pl.cdiv(batch, m_tiles), sub)
        m_pad = tm * m_tiles
    else:
        tm = m_pad

    # Megacore (v7x: 2 TensorCores) — give a parallel axis >= 2 blocks if we can.
    if m_pad == tm and n_pad == tn and n_pad >= 2 * _LANE:
        tn = _pick_tile(n_pad, n_pad // 2)

    # K: keep the reduction resident when it fits the per-generation VMEM
    # budget, otherwise tile it (innermost "arbitrary" axis + f32 accumulator).
    tk, k_pad, k_tiled = in_dim, in_dim, False

    def fits():
        return _block_footprint(tm, tn, tk, x_item, w_item, o_item,
                                k_tiled) <= budget

    while not fits():
        if tm > max(2 * sub, 256):
            tm = max(_round_up(tm // 2, sub), sub)
            m_pad = _round_up(batch, tm)
        elif tn > 2 * _LANE:
            tn = _pick_tile(n_pad, tn // 2)
        elif not k_tiled:
            k_tiled = True
            k_pad = _round_up(in_dim, _LANE)
            tk = _pick_tile(k_pad, max(_LANE, tk // 2))
        elif tk > _LANE:
            tk = _pick_tile(k_pad, tk // 2)
        elif tn > _LANE:
            tn = _pick_tile(n_pad, tn // 2)
        elif tm > sub:
            tm = max(_round_up(tm // 2, sub), sub)
            m_pad = _round_up(batch, tm)
        else:
            break  # smallest legal tiles; explicit vmem limit below covers the rest

    return tm, tn, tk, m_pad, n_pad, k_pad


def _equal_linear_kernel(x_ref, w_ref, b_ref, o_ref, *, scale, activation):
    # x:(tm,tk), w:(tn,tk) in the native PyTorch layout; contract the last dims
    # (MXU consumes this directly — no XLU transpose), accumulate in f32.
    out = lax.dot_general(x_ref[...], w_ref[...],
                          dimension_numbers=(((1,), (1,)), ((), ())),
                          preferred_element_type=jnp.float32)
    out = out * scale + b_ref[...]
    if activation:
        out = jnp.maximum(out, 0.2 * out)  # sqrt(2) gain pre-folded into scale/bias
    o_ref[...] = out.astype(o_ref.dtype)


def _equal_linear_kernel_ktiled(x_ref, w_ref, b_ref, o_ref, acc_ref, *,
                                scale, activation):
    k = pl.program_id(2)

    @pl.when(k == 0)
    def _init():
        acc_ref[...] = jnp.zeros_like(acc_ref)

    acc_ref[...] += lax.dot_general(x_ref[...], w_ref[...],
                                    dimension_numbers=(((1,), (1,)), ((), ())),
                                    preferred_element_type=jnp.float32)

    @pl.when(k == pl.num_programs(2) - 1)
    def _finalize():
        out = acc_ref[...] * scale + b_ref[...]
        if activation:
            out = jnp.maximum(out, 0.2 * out)
        o_ref[...] = out.astype(o_ref.dtype)


def equal_linear(x, weight, bias=None, *, lr_mul=1.0, activation=None,
                 block_m=512, block_n=256, compute_dtype=None,
                 vmem_budget_bytes=None):
    """EqualLinear forward.  x: (B, in_dim); weight: (out_dim, in_dim); bias: (out_dim,)."""
    batch, in_dim = x.shape
    out_dim, in_dim_w = weight.shape
    assert in_dim == in_dim_w, "weight must be (out_dim, in_dim)"

    # Precision policy: the MXU runs in the activation dtype; weight is cast
    # only if it differs.  compute_dtype=jnp.bfloat16 opts in to the fast bf16
    # MXU path (numerics drift vs f32 is the caller's decision).
    if compute_dtype is not None:
        x = x.astype(compute_dtype)
    if weight.dtype != x.dtype:
        weight = weight.astype(x.dtype)
    out_dtype = x.dtype

    if bias is None:
        bias = jnp.zeros((out_dim,), jnp.float32)

    # Fold the sqrt(2) fused-leaky-relu gain into the scalar scale and the
    # (1-D, cheap) bias so the epilogue is a single mul + add + max.
    scale = lr_mul / math.sqrt(in_dim)
    gain = math.sqrt(2.0) if activation else 1.0
    scale_eff = scale * gain
    bias_eff = (bias.astype(jnp.float32) * (lr_mul * gain)).reshape(1, out_dim)

    x_item = jnp.dtype(x.dtype).itemsize
    w_item = jnp.dtype(weight.dtype).itemsize
    o_item = jnp.dtype(out_dtype).itemsize

    vmem_cap = _vmem_capacity_bytes()
    budget = (vmem_budget_bytes if vmem_budget_bytes is not None
              else int(vmem_cap * 0.55))

    tm, tn, tk, m_pad, n_pad, k_pad = _choose_tiles(
        batch, out_dim, in_dim, x_item, w_item, o_item, block_m, block_n, budget)
    m_tiles, n_tiles, k_tiles = m_pad // tm, n_pad // tn, k_pad // tk

    # Zero padding only when needed.  Weight/bias pads are static; in a real
    # model cache them once at parameter init instead of per forward call.
    x_p = x
    if m_pad != batch or k_pad != in_dim:
        x_p = jnp.pad(x, ((0, m_pad - batch), (0, k_pad - in_dim)))
    w_p = weight
    if n_pad != out_dim or k_pad != in_dim:
        w_p = jnp.pad(weight, ((0, n_pad - out_dim), (0, k_pad - in_dim)))
    b_p = bias_eff
    if n_pad != out_dim:
        b_p = jnp.pad(bias_eff, ((0, 0), (0, n_pad - out_dim)))

    # Grid order: the operand whose block index stays constant across the inner
    # sweep is fetched from HBM only once (Pallas skips the DMA when the block
    # index is unchanged).  K (reduction) is always the innermost axis.
    size_x = m_pad * k_pad * x_item
    size_w = n_pad * k_pad * w_item
    batch_inner = (n_tiles - 1) * size_x <= (m_tiles - 1) * size_w
    if batch_inner:
        grid = (n_tiles, m_tiles, k_tiles)
        x_map = lambda j, i, k: (i, k)
        w_map = lambda j, i, k: (j, k)
        b_map = lambda j, i, k: (0, j)
        o_map = lambda j, i, k: (i, j)
        x_reads = n_tiles
        w_reads = 1 if k_tiles == 1 else m_tiles
    else:
        grid = (m_tiles, n_tiles, k_tiles)
        x_map = lambda i, j, k: (i, k)
        w_map = lambda i, j, k: (j, k)
        b_map = lambda i, j, k: (0, j)
        o_map = lambda i, j, k: (i, j)
        x_reads = 1 if k_tiles == 1 else n_tiles
        w_reads = m_tiles

    if k_tiles > 1:
        kernel = functools.partial(_equal_linear_kernel_ktiled,
                                   scale=scale_eff, activation=bool(activation))
        scratch_shapes = [pltpu.VMEM((tm, tn), jnp.float32)]
    else:
        kernel = functools.partial(_equal_linear_kernel,
                                   scale=scale_eff, activation=bool(activation))
        scratch_shapes = []

    footprint = _block_footprint(tm, tn, tk, x_item, w_item, o_item, k_tiles > 1)
    vmem_limit = int(min(max(int(footprint * 1.5) + (2 << 20), 16 << 20),
                         int(vmem_cap * 0.9)))

    cost = pl.CostEstimate(
        flops=2 * m_pad * n_pad * k_pad,
        transcendentals=0,
        bytes_accessed=int(x_reads * size_x + w_reads * size_w
                           + n_pad * 4 + m_pad * n_pad * o_item))

    out = pl.pallas_call(
        kernel,
        out_shape=jax.ShapeDtypeStruct((m_pad, n_pad), out_dtype),
        grid=grid,
        in_specs=[
            pl.BlockSpec((tm, tk), x_map),   # x tile
            pl.BlockSpec((tn, tk), w_map),   # weight tile, PyTorch (out,in) layout
            pl.BlockSpec((1, tn), b_map),    # pre-scaled f32 bias tile
        ],
        out_specs=pl.BlockSpec((tm, tn), o_map),
        scratch_shapes=scratch_shapes,
        compiler_params=pltpu.CompilerParams(
            dimension_semantics=("parallel", "parallel", "arbitrary"),
            vmem_limit_bytes=vmem_limit),
        cost_estimate=cost,
    )(x_p, w_p, b_p)

    return out[:batch, :out_dim]


def _reference(x, weight, bias, *, lr_mul=1.0, activation=None):
    scale = lr_mul / math.sqrt(x.shape[1])
    out = x.astype(jnp.float32) @ (weight.astype(jnp.float32) * scale).T
    out = out + bias.astype(jnp.float32) * lr_mul
    if activation:
        out = jnp.where(out >= 0.0, out, 0.2 * out) * math.sqrt(2.0)
    return out.astype(x.dtype)


if __name__ == "__main__":
    key = jax.random.PRNGKey(0)

    # --- Case 1: canonical small EqualLinear (N padded to 128 lanes) ---
    batch, in_dim, out_dim = 8, 32, 64
    lr_mul = 0.01
    k_x, k_w, key = jax.random.split(key, 3)
    x = jax.random.normal(k_x, (batch, in_dim), dtype=jnp.float32)
    weight = jax.random.normal(k_w, (out_dim, in_dim), dtype=jnp.float32) / lr_mul
    bias = jnp.zeros((out_dim,), dtype=jnp.float32)

    out_lin = jax.block_until_ready(
        equal_linear(x, weight, bias, lr_mul=lr_mul, activation=None))
    out_act = jax.block_until_ready(
        equal_linear(x, weight, bias, lr_mul=lr_mul, activation="fused_lrelu"))
    ref_lin = _reference(x, weight, bias, lr_mul=lr_mul, activation=None)
    ref_act = _reference(x, weight, bias, lr_mul=lr_mul, activation="fused_lrelu")
    assert out_lin.shape == (batch, out_dim) and out_act.shape == (batch, out_dim)
    assert jnp.allclose(out_lin, ref_lin, atol=1e-4, rtol=1e-4)
    assert jnp.allclose(out_act, ref_act, atol=1e-4, rtol=1e-4)

    # --- Case 2: multi-tile N grid, K resident, fused epilogue ---
    batch2, in_dim2, out_dim2 = 320, 256, 384
    k_x2, k_w2, k_b2, key = jax.random.split(key, 4)
    x2 = jax.random.normal(k_x2, (batch2, in_dim2), dtype=jnp.float32)
    w2 = jax.random.normal(k_w2, (out_dim2, in_dim2), dtype=jnp.float32)
    b2 = 0.1 * jax.random.normal(k_b2, (out_dim2,), dtype=jnp.float32)
    out2 = jax.block_until_ready(
        equal_linear(x2, w2, b2, lr_mul=1.0, activation="fused_lrelu"))
    ref2 = _reference(x2, w2, b2, lr_mul=1.0, activation="fused_lrelu")
    assert out2.shape == (batch2, out_dim2)
    assert jnp.allclose(out2, ref2, atol=1e-3, rtol=1e-3)

    # --- Case 3: force the K-tiled accumulator path with a tiny VMEM budget ---
    batch3, in_dim3, out_dim3 = 64, 512, 384
    k_x3, k_w3, k_b3 = jax.random.split(key, 3)
    x3 = jax.random.normal(k_x3, (batch3, in_dim3), dtype=jnp.float32)
    w3 = jax.random.normal(k_w3, (out_dim3, in_dim3), dtype=jnp.float32)
    b3 = 0.1 * jax.random.normal(k_b3, (out_dim3,), dtype=jnp.float32)
    out3 = jax.block_until_ready(
        equal_linear(x3, w3, b3, lr_mul=1.0, activation="fused_lrelu",
                     vmem_budget_bytes=512 * 1024))
    ref3 = _reference(x3, w3, b3, lr_mul=1.0, activation="fused_lrelu")
    assert out3.shape == (batch3, out_dim3)
    assert jnp.allclose(out3, ref3, atol=1e-3, rtol=1e-3)

    print("KERNEL_OK")
</pallas_src>

<mosaic_0001>
module attributes {stable_mosaic.version = 11 : i64} {
  func.func @_equal_linear_kernel(%arg0: i32, %arg1: i32, %arg2: i32, %arg3: memref<8x32xf32, #tpu.memory_space<vmem>>, %arg4: memref<128x32xf32, #tpu.memory_space<vmem>>, %arg5: memref<1x128xf32, #tpu.memory_space<vmem>>, %arg6: memref<8x128xf32, #tpu.memory_space<vmem>>) attributes {dimension_semantics = [#tpu.dimension_semantics<parallel>, #tpu.dimension_semantics<parallel>, #tpu.dimension_semantics<arbitrary>], iteration_bounds = array<i64: 1, 1, 1>, scalar_prefetch = 0 : i64, scratch_operands = 0 : i64, tpu.core_type = #tpu.core_type<tc>, window_params = [{transform_indices = @transform_0, window_bounds = array<i64: 8, 32>}, {transform_indices = @transform_1, window_bounds = array<i64: 128, 32>}, {transform_indices = @transform_2, window_bounds = array<i64: 1, 128>}, {transform_indices = @transform_3, window_bounds = array<i64: 8, 128>}]} {
    %c0 = arith.constant 0 : index
    %c0_0 = arith.constant 0 : index
    %0 = vector.load %arg3[%c0, %c0_0] : memref<8x32xf32, #tpu.memory_space<vmem>>, vector<8x32xf32>
    %c0_1 = arith.constant 0 : index
    %c0_2 = arith.constant 0 : index
    %1 = vector.load %arg4[%c0_1, %c0_2] : memref<128x32xf32, #tpu.memory_space<vmem>>, vector<128x32xf32>
    %cst = arith.constant dense<0.000000e+00> : vector<8x128xf32>
    %2 = tpu.matmul %0, %1, %cst {dimension_numbers = #tpu.dot_dimension_numbers<[1], [1], [0], [0], [0, 0, 1, 0], [], []>} : vector<8x32xf32>, vector<128x32xf32>, vector<8x128xf32> -> vector<8x128xf32>
    %cst_3 = arith.constant 0.00176776689 : f32
    %3 = vector.broadcast %cst_3 : f32 to vector<8x128xf32>
    %4 = arith.mulf %2, %3 : vector<8x128xf32>
    %c0_4 = arith.constant 0 : index
    %c0_5 = arith.constant 0 : index
    %5 = vector.load %arg5[%c0_4, %c0_5] : memref<1x128xf32, #tpu.memory_space<vmem>>, vector<1x128xf32>
    %6 = vector.broadcast %5 : vector<1x128xf32> to vector<8x128xf32>
    %7 = arith.addf %4, %6 : vector<8x128xf32>
    %c0_6 = arith.constant 0 : index
    %c0_7 = arith.constant 0 : index
    %8 = vector.load %arg6[%c0_6, %c0_7] : memref<8x128xf32, #tpu.memory_space<vmem>>, vector<8x128xf32>
    tpu.vector_store %arg6[%c0_6, %c0_7], %7 {strides = array<i32>} : memref<8x128xf32, #tpu.memory_space<vmem>>, vector<8x128xf32>,
    return
  }
  func.func @transform_0(%arg0: i32, %arg1: i32, %arg2: i32) -> (i32, i32) {
    %c0_i32 = arith.constant 0 : i32
    return %arg1, %arg2 : i32, i32
  }
  func.func @transform_1(%arg0: i32, %arg1: i32, %arg2: i32) -> (i32, i32) {
    %c0_i32 = arith.constant 0 : i32
    return %arg0, %arg2 : i32, i32
  }
  func.func @transform_2(%arg0: i32, %arg1: i32, %arg2: i32) -> (i32, i32) {
    %c0_i32 = arith.constant 0 : i32
    %c0_i32_0 = arith.constant 0 : i32
    return %c0_i32, %arg0 : i32, i32
  }
  func.func @transform_3(%arg0: i32, %arg1: i32, %arg2: i32) -> (i32, i32) {
    %c0_i32 = arith.constant 0 : i32
    return %arg1, %arg0 : i32, i32
  }
}

</mosaic_0001>

<llo_original>
// kernel: tpu_custom_call.1
$region0: #{tpu_custom_call.1}
  #allocation0 [shape = 'u32[]', space=smem, size = 0x4, offset = 0x4, fixed_abs, tag = 'smem constant byte address 0x4 - core index']
  #allocation1 [shape = 'u32[144,128]{1,0:T(1,128)}', space=vmem, size = 0x12000, scoped, tag = 'internal scratch']
  %s0 = inlined_call_operand.vmem [shape: f32[8,32], index: 0, kind: input, shape index: {}]
  %s1 = inlined_call_operand.vmem [shape: f32[128,32], index: 1, kind: input, shape index: {}]
  %s2 = inlined_call_operand.vmem [shape: f32[1,128], index: 2, kind: input, shape index: {}]
  %s3 = inlined_call_operand.hbm [shape: f32[8,128], index: 3, kind: output, shape index: {}]
  %s4 = sld [smem:[#allocation0]]
  $region22: #{tpu_custom_call.1} parent=0
    _
  %s6 = ssub.s32 1, %s4
  %s7 = scalar_select 0, %s6, %s4
  $region1: #{tpu_custom_call.1} parent=0
    #allocation2 [shape = 'u8[4096]{0}', space=vmem, size = 0x1000, scoped, tag = 'output window, operand 0, single buffered']
    #allocation3 [shape = 's32[1]{0}', space=sflag, size = 0x4, scoped, tag = 'scoped memory for tpu_custom_call.1']
    %8 = vsyncpa [#allocation3], 0
    // Predicated region
    $region2: #{tpu_custom_call.1} parent=1 // pred_check
      _
    $region3: #{tpu_custom_call.1} parent=1 // pred_check_branch
      %10 = sbr.rel (0) target = $region5
    $region4: #{tpu_custom_call.1} parent=1 // pred_region
      _
    $region5: #{tpu_custom_call.1} parent=1 // pred_fallthru
      _
    // Predicated region
    $region6: #{tpu_custom_call.1} parent=1 // pred_check
      _
    $region7: #{tpu_custom_call.1} parent=1 // pred_check_branch
      %12 = sbr.rel (0) target = $region9
    $region8: #{tpu_custom_call.1} parent=1 // pred_region
      _
    $region9: #{tpu_custom_call.1} parent=1 // pred_fallthru
      _
    // Predicated region
    $region10: #{tpu_custom_call.1} parent=1 // pred_check
      _
    $region11: #{tpu_custom_call.1} parent=1 // pred_check_branch
      %14 = sbr.rel (0) target = $region13
    $region12: #{tpu_custom_call.1} parent=1 // pred_region
      _
    $region13: #{tpu_custom_call.1} parent=1 // pred_fallthru
      _
    %v15 = vld [vmem:[%s0] sm:$0xff]
    %v16 = vld [vmem:[%s1] sm:$0xff]
    %v17 = vld [vmem:[%s1 + $0x8] sm:$0xff]
    %v18 = vld [vmem:[%s1 + $0x10] sm:$0xff]
    %v19 = vld [vmem:[%s1 + $0x18] sm:$0xff]
    %v20 = vld [vmem:[%s1 + $0x20] sm:$0xff]
    %v21 = vld [vmem:[%s1 + $0x28] sm:$0xff]
    %v22 = vld [vmem:[%s1 + $0x30] sm:$0xff]
    %v23 = vld [vmem:[%s1 + $0x38] sm:$0xff]
    %v24 = vld [vmem:[%s1 + $0x40] sm:$0xff]
    %v25 = vld [vmem:[%s1 + $0x48] sm:$0xff]
    %v26 = vld [vmem:[%s1 + $0x50] sm:$0xff]
    %v27 = vld [vmem:[%s1 + $0x58] sm:$0xff]
    %v28 = vld [vmem:[%s1 + $0x60] sm:$0xff]
    %v29 = vld [vmem:[%s1 + $0x68] sm:$0xff]
    %v30 = vld [vmem:[%s1 + $0x70] sm:$0xff]
    %v31 = vld [vmem:[%s1 + $0x78] sm:$0xff]
    %vm32 = vcmask 261120
    %v34 = vsel %vm32, %v15, 0
    %v37 = vsel %vm32, %v16, 0
    %v40 = vsel %vm32, %v17, 0
    %v43 = vsel %vm32, %v18, 0
    %v46 = vsel %vm32, %v19, 0
    %v49 = vsel %vm32, %v20, 0
    %v52 = vsel %vm32, %v21, 0
    %v55 = vsel %vm32, %v22, 0
    %v58 = vsel %vm32, %v23, 0
    %v61 = vsel %vm32, %v24, 0
    %v64 = vsel %vm32, %v25, 0
    %v67 = vsel %vm32, %v26, 0
    %v70 = vsel %vm32, %v27, 0
    %v73 = vsel %vm32, %v28, 0
    %v76 = vsel %vm32, %v29, 0
    %v79 = vsel %vm32, %v30, 0
    %v82 = vsel %vm32, %v31, 0
    %84 = vmatprep.subr.mxu0 0.0
    %85 = vmatpush1.xpose.msra.mxu0 %v37
    %86 = vmatprep.subr.mxu0 0.0
    %87 = vmatpush1.xpose.msra.mxu0 %v40
    %88 = vmatprep.subr.mxu0 0.0
    %89 = vmatpush1.xpose.msra.mxu0 %v43
    %90 = vmatprep.subr.mxu0 0.0
    %91 = vmatpush1.xpose.msra.mxu0 %v46
    %92 = vmatprep.subr.mxu0 0.0
    %93 = vmatpush1.xpose.msra.mxu0 %v49
    %94 = vmatprep.subr.mxu0 0.0
    %95 = vmatpush1.xpose.msra.mxu0 %v52
    %96 = vmatprep.subr.mxu0 0.0
    %97 = vmatpush1.xpose.msra.mxu0 %v55
    %98 = vmatprep.subr.mxu0 0.0
    %99 = vmatpush1.xpose.msra.mxu0 %v58
    %100 = vmatprep.subr.mxu0 0.0
    %101 = vmatpush1.xpose.msra.mxu0 %v61
    %102 = vmatprep.subr.mxu0 0.0
    %103 = vmatpush1.xpose.msra.mxu0 %v64
    %104 = vmatprep.subr.mxu0 0.0
    %105 = vmatpush1.xpose.msra.mxu0 %v67
    %106 = vmatprep.subr.mxu0 0.0
    %107 = vmatpush1.xpose.msra.mxu0 %v70
    %108 = vmatprep.subr.mxu0 0.0
    %109 = vmatpush1.xpose.msra.mxu0 %v73
    %110 = vmatprep.subr.mxu0 0.0
    %111 = vmatpush1.xpose.msra.mxu0 %v76
    %112 = vmatprep.subr.mxu0 0.0
    %113 = vmatpush1.xpose.msra.mxu0 %v79
    %114 = vmatprep.subr.mxu0 0.0
    %115 = vmatpush1.xpose.msra.mxu0 %v82
    %116 = vmatprep.subr.mxu0 0.0
    %117 = vmatpush1.xpose.msra.mxu0 0.0
    %118 = vmatprep.subr.mxu0 0.0
    %119 = vmatpush1.xpose.msra.mxu0 0.0
    %120 = vmatprep.subr.mxu0 0.0
    %121 = vmatpush1.xpose.msra.mxu0 0.0
    %122 = vmatprep.subr.mxu0 0.0
    %123 = vmatpush1.xpose.msra.mxu0 0.0
    %124 = vmatprep.subr.mxu0 0.0
    %125 = vmatpush1.xpose.msra.mxu0 0.0
    %126 = vmatprep.subr.mxu0 0.0
    %127 = vmatpush1.xpose.msra.mxu0 0.0
    %128 = vmatprep.subr.mxu0 0.0
    %129 = vmatpush1.xpose.msra.mxu0 0.0
    %130 = vmatprep.subr.mxu0 0.0
    %131 = vmatpush1.xpose.msra.mxu0 0.0
    %132 = vmatprep.subr.mxu0 0.0
    %133 = vmatpush1.xpose.msra.mxu0 0.0
    %134 = vmatprep.subr.mxu0 0.0
    %135 = vmatpush1.xpose.msra.mxu0 0.0
    %136 = vmatprep.subr.mxu0 0.0
    %137 = vmatpush1.xpose.msra.mxu0 0.0
    %138 = vmatprep.subr.mxu0 0.0
    %139 = vmatpush1.xpose.msra.mxu0 0.0
    %140 = vmatprep.subr.mxu0 0.0
    %141 = vmatpush1.xpose.msra.mxu0 0.0
    %142 = vmatprep.subr.mxu0 0.0
    %143 = vmatpush1.xpose.msra.mxu0 0.0
    %144 = vmatprep.subr.mxu0 0.0
    %145 = vmatpush1.xpose.msra.mxu0 0.0
    %146 = vmatprep.subr.mxu0 0.0
    %147 = vmatpush1.xpose.msra.mxu0 0.0
    %148 = vmatprep.mubr.f32.mxu0 0.0
    %149 = vmatmul.mubr.f32.gmra.mrb[0].mxu0 %v34
    %v150 = vpop.f32.mrb[0].mxu0
    %v151 = vadd.f32 0.0, %v150
    %v152 = vpop.f32.mrb[0].mxu0
    %153 = vdwg.mxu0
    %v154 = vmul.f32 %v151, 0.0017677669
    %v155 = vld [vmem:[%s2] sm:$0x1]
    %v157 = vlaneseq
    %v158 = vshrl.u32 %v157, 7
    %v159 = vsub.s32 0, %v158
    %v160 = vrot.slane %v155, %v159
    %v162 = vadd.f32 %v154, %v160
    %163 = vst [vmem:[#allocation2] sm:$0xff] %v162
    // Predicated region
    $region14: #{tpu_custom_call.1} parent=1 // pred_check
      _
    $region15: #{tpu_custom_call.1} parent=1 // pred_check_branch
      %165 = sbr.rel (0) target = $region17
    $region16: #{tpu_custom_call.1} parent=1 // pred_region
      %s167 = ssub.s32 128, 128
      %168 = vsyncadd [#allocation3], %s167
      %s170 = sshll.u32 [#allocation2], 4
      %s171 = int_to_ptr.vmem [resolvable:$true] %s170
      %173 = dma.vmem_to_hbm [thread:$0]  %s171, 128, %s3, [#allocation3]
    $region17: #{tpu_custom_call.1} parent=1 // pred_fallthru
      _
    // Predicated region
    $region18: #{tpu_custom_call.1} parent=1 // pred_check
      _
    $region19: #{tpu_custom_call.1} parent=1 // pred_check_branch
      %175 = sbr.rel (0) target = $region21
    $region20: #{tpu_custom_call.1} parent=1 // pred_region
      %176 = dma.done [#allocation3], 128
    $region21: #{tpu_custom_call.1} parent=1 // pred_fallthru
      _
    %177 = vsyncpa [#allocation3], 1

</llo_original>
